<compile_context>
chip_gen: v6e
topology: v6e:2x2x1
jax: 0.10.0
libtpu: 0.0.40
codegen_flags: <defaults>
</compile_context>

<pallas_src>
from typing import Dict, List, Tuple

import jax
import jax.numpy as jnp
from jax.experimental import pallas as pl
from jax.experimental.pallas import tpu as pltpu


def _make_fusion_kernel(C: int, proj_dim: int):
    """Kernel over refs: (x_0..x_{C-1}, Wcomb_0..Wcomb_{C-1}, b_comb, out)."""

    def kernel(*refs):
        x_refs = refs[:C]
        w_refs = refs[C:2 * C]
        b_ref = refs[2 * C]
        out_ref = refs[2 * C + 1]

        # Single fused MXU pass per channel: y = sum_c x_c @ W_c_comb + b_comb
        #   y[:, :C]                 -> attention logits
        #   y[:, C + c*P : C+(c+1)P] -> projection of channel c
        acc = jnp.dot(x_refs[0][...], w_refs[0][...],
                      preferred_element_type=jnp.float32)
        for c in range(1, C):
            acc = acc + jnp.dot(x_refs[c][...], w_refs[c][...],
                                preferred_element_type=jnp.float32)
        y = acc + b_ref[...].astype(jnp.float32)          # (TB, C + C*P), f32

        # softmax over the C attention logits
        logits = y[:, :C]
        m = jnp.max(logits, axis=-1, keepdims=True)
        e = jnp.exp(logits - m)
        attn = e * pl.reciprocal(jnp.sum(e, axis=-1, keepdims=True), approx=True)

        # attention-weighted sum over the packed per-channel projections
        fused = attn[:, 0:1] * y[:, C:C + proj_dim]
        for c in range(1, C):
            lo = C + c * proj_dim
            fused = fused + attn[:, c:c + 1] * y[:, lo:lo + proj_dim]

        out_ref[...] = fused.astype(out_ref.dtype)

    return kernel


def prepare_fused_params(params, channel_dims: List[int]
                         ) -> Tuple[List[jnp.ndarray], jnp.ndarray]:
    """Pack attention + per-channel projection weights into per-channel
    combined weights (done once per parameter set, ordinary XLA ops)."""
    C = len(channel_dims)
    P = params["wc"][0].shape[1]
    w_comb = []
    off = 0
    for c, d in enumerate(channel_dims):
        blocks = [params["wa"][off:off + d, :]]                     # (d, C)
        for j in range(C):
            if j == c:
                blocks.append(params["wc"][c])                      # (d, P)
            else:
                blocks.append(jnp.zeros((d, P), params["wc"][c].dtype))
        w_comb.append(jnp.concatenate(blocks, axis=-1))             # (d, C+C*P)
        off += d
    b_comb = jnp.concatenate([params["ba"]] + list(params["bc"]), axis=-1)
    return w_comb, b_comb


def attention_fusion(embeddings: Dict[str, jnp.ndarray],
                     w_comb: List[jnp.ndarray],
                     b_comb: jnp.ndarray) -> jnp.ndarray:
    """Fused forward.  w_comb / b_comb come from prepare_fused_params."""
    keys = sorted(embeddings.keys())
    C = len(keys)
    xs = [embeddings[k] for k in keys]
    channel_dims = [x.shape[-1] for x in xs]
    B = xs[0].shape[0]
    N = b_comb.shape[-1]               # C + C*P (logits + packed projections)
    P = (N - C) // C

    # Batch tiling: big tiles amortize the ~0.35 us / grid-step overhead.
    TB = min(512, ((B + 7) // 8) * 8)
    Bp = ((B + TB - 1) // TB) * TB
    if Bp != B:
        xs = [jnp.pad(x, ((0, Bp - B), (0, 0))) for x in xs]
    grid = (Bp // TB,)

    in_specs = [pl.BlockSpec((TB, d), lambda i: (i, 0)) for d in channel_dims]
    in_specs += [pl.BlockSpec((d, N), lambda i: (0, 0)) for d in channel_dims]
    in_specs += [pl.BlockSpec((1, N), lambda i: (0, 0))]
    out_spec = pl.BlockSpec((TB, P), lambda i: (i, 0))

    # VMEM budget: resident weights + double-buffered x tiles + output tiles.
    elt = 4
    vmem = N * elt + 2 * TB * P * elt
    for d in channel_dims:
        vmem += 2 * TB * d * elt + d * N * elt
    vmem_limit = int(min(max(4 * vmem, 8 * 2 ** 20), 48 * 2 ** 20))

    out = pl.pallas_call(
        _make_fusion_kernel(C, P),
        grid=grid,
        in_specs=in_specs,
        out_specs=out_spec,
        out_shape=jax.ShapeDtypeStruct((Bp, P), xs[0].dtype),
        compiler_params=pltpu.CompilerParams(
            dimension_semantics=("parallel",),
            vmem_limit_bytes=vmem_limit,
        ),
    )(*xs, *w_comb, b_comb)
    return out[:B]


def init_params(channel_to_encoder_dim: Dict[str, int], key, proj_dim=None):
    keys_sorted = sorted(channel_to_encoder_dim.keys())
    dims = [channel_to_encoder_dim[k] for k in keys_sorted]
    attn_in_dim = sum(dims)
    C = len(dims)
    if proj_dim is None:
        proj_dim = min(dims)

    k_iter = jax.random.split(key, 2 + 2 * C)
    wa = jax.random.uniform(k_iter[0], (attn_in_dim, C), jnp.float32, -0.1, 0.1)
    ba = jax.random.uniform(k_iter[1], (1, C), jnp.float32, -0.1, 0.1)
    wc, bc = [], []
    for i, d in enumerate(dims):
        wc.append(jax.random.uniform(k_iter[2 + 2 * i], (d, proj_dim),
                                     jnp.float32, -0.1, 0.1))
        bc.append(jax.random.uniform(k_iter[3 + 2 * i], (1, proj_dim),
                                     jnp.float32, -0.1, 0.1))
    return {"wa": wa, "ba": ba, "wc": wc, "bc": bc}, proj_dim


def reference(embeddings, params):
    """Pure-JAX reference mirroring the PyTorch forward."""
    keys_sorted = sorted(embeddings.keys())
    x = jnp.concatenate([embeddings[k] for k in keys_sorted], axis=-1)
    logits = x @ params["wa"] + params["ba"]
    attn = jax.nn.softmax(logits, axis=-1)
    fused = 0.0
    for i, k in enumerate(keys_sorted):
        proj = embeddings[k] @ params["wc"][i] + params["bc"][i]
        fused = fused + attn[:, i:i + 1] * proj
    return fused


if __name__ == "__main__":
    channel_to_encoder_dim = {"audio": 24, "image": 32, "text": 16}
    B = 8

    key = jax.random.PRNGKey(0)
    kp, ka, ki, kt = jax.random.split(key, 4)
    embeddings = {
        "audio": jax.random.normal(ka, (B, 24), jnp.float32),
        "image": jax.random.normal(ki, (B, 32), jnp.float32),
        "text": jax.random.normal(kt, (B, 16), jnp.float32),
    }

    params, proj_dim = init_params(channel_to_encoder_dim, kp)

    keys_sorted = sorted(channel_to_encoder_dim.keys())
    channel_dims = [channel_to_encoder_dim[k] for k in keys_sorted]
    w_comb, b_comb = prepare_fused_params(params, channel_dims)

    fused = attention_fusion(embeddings, w_comb, b_comb)
    fused = jax.block_until_ready(fused)

    ref = reference(embeddings, params)
    assert fused.shape == (B, proj_dim)
    # tolerance loosened for the EUP approx-reciprocal softmax denominator
    assert jnp.allclose(fused, ref, atol=1e-3, rtol=1e-3)

    print("KERNEL_OK")
</pallas_src>

<mosaic_0001>
module attributes {stable_mosaic.version = 11 : i64} {
  func.func @kernel(%arg0: i32, %arg1: memref<8x24xf32, #tpu.memory_space<vmem>>, %arg2: memref<8x32xf32, #tpu.memory_space<vmem>>, %arg3: memref<8x16xf32, #tpu.memory_space<vmem>>, %arg4: memref<24x51xf32, #tpu.memory_space<vmem>>, %arg5: memref<32x51xf32, #tpu.memory_space<vmem>>, %arg6: memref<16x51xf32, #tpu.memory_space<vmem>>, %arg7: memref<1x51xf32, #tpu.memory_space<vmem>>, %arg8: memref<8x16xf32, #tpu.memory_space<vmem>>) attributes {dimension_semantics = [#tpu.dimension_semantics<parallel>], iteration_bounds = array<i64: 1>, scalar_prefetch = 0 : i64, scratch_operands = 0 : i64, tpu.core_type = #tpu.core_type<tc>, window_params = [{transform_indices = @transform_0, window_bounds = array<i64: 8, 24>}, {transform_indices = @transform_1, window_bounds = array<i64: 8, 32>}, {transform_indices = @transform_2, window_bounds = array<i64: 8, 16>}, {pipeline_mode = #tpu.pipeline_mode<synchronous>, transform_indices = @transform_3, window_bounds = array<i64: 24, 51>}, {pipeline_mode = #tpu.pipeline_mode<synchronous>, transform_indices = @transform_4, window_bounds = array<i64: 32, 51>}, {pipeline_mode = #tpu.pipeline_mode<synchronous>, transform_indices = @transform_5, window_bounds = array<i64: 16, 51>}, {pipeline_mode = #tpu.pipeline_mode<synchronous>, transform_indices = @transform_6, window_bounds = array<i64: 1, 51>}, {transform_indices = @transform_7, window_bounds = array<i64: 8, 16>}]} {
    %c0 = arith.constant 0 : index
    %c0_0 = arith.constant 0 : index
    %0 = vector.load %arg1[%c0, %c0_0] : memref<8x24xf32, #tpu.memory_space<vmem>>, vector<8x24xf32>
    %c0_1 = arith.constant 0 : index
    %c0_2 = arith.constant 0 : index
    %1 = vector.load %arg4[%c0_1, %c0_2] : memref<24x51xf32, #tpu.memory_space<vmem>>, vector<24x51xf32>
    %cst = arith.constant dense<0.000000e+00> : vector<8x51xf32>
    %2 = tpu.matmul %0, %1, %cst {dimension_numbers = #tpu.dot_dimension_numbers<[1], [0], [0], [1], [0, 0, 1, 1], [], []>} : vector<8x24xf32>, vector<24x51xf32>, vector<8x51xf32> -> vector<8x51xf32>
    %c0_3 = arith.constant 0 : index
    %c0_4 = arith.constant 0 : index
    %3 = vector.load %arg2[%c0_3, %c0_4] : memref<8x32xf32, #tpu.memory_space<vmem>>, vector<8x32xf32>
    %c0_5 = arith.constant 0 : index
    %c0_6 = arith.constant 0 : index
    %4 = vector.load %arg5[%c0_5, %c0_6] : memref<32x51xf32, #tpu.memory_space<vmem>>, vector<32x51xf32>
    %cst_7 = arith.constant dense<0.000000e+00> : vector<8x51xf32>
    %5 = tpu.matmul %3, %4, %cst_7 {dimension_numbers = #tpu.dot_dimension_numbers<[1], [0], [0], [1], [0, 0, 1, 1], [], []>} : vector<8x32xf32>, vector<32x51xf32>, vector<8x51xf32> -> vector<8x51xf32>
    %6 = arith.addf %2, %5 : vector<8x51xf32>
    %c0_8 = arith.constant 0 : index
    %c0_9 = arith.constant 0 : index
    %7 = vector.load %arg3[%c0_8, %c0_9] : memref<8x16xf32, #tpu.memory_space<vmem>>, vector<8x16xf32>
    %c0_10 = arith.constant 0 : index
    %c0_11 = arith.constant 0 : index
    %8 = vector.load %arg6[%c0_10, %c0_11] : memref<16x51xf32, #tpu.memory_space<vmem>>, vector<16x51xf32>
    %cst_12 = arith.constant dense<0.000000e+00> : vector<8x51xf32>
    %9 = tpu.matmul %7, %8, %cst_12 {dimension_numbers = #tpu.dot_dimension_numbers<[1], [0], [0], [1], [0, 0, 1, 1], [], []>} : vector<8x16xf32>, vector<16x51xf32>, vector<8x51xf32> -> vector<8x51xf32>
    %10 = arith.addf %6, %9 : vector<8x51xf32>
    %c0_13 = arith.constant 0 : index
    %c0_14 = arith.constant 0 : index
    %11 = vector.load %arg7[%c0_13, %c0_14] : memref<1x51xf32, #tpu.memory_space<vmem>>, vector<1x51xf32>
    %12 = vector.broadcast %11 : vector<1x51xf32> to vector<8x51xf32>
    %13 = arith.addf %10, %12 : vector<8x51xf32>
    %14 = vector.extract_strided_slice %13 {offsets = [0, 0], sizes = [8, 3], strides = [1, 1]} : vector<8x51xf32> to vector<8x3xf32>
    %cst_15 = arith.constant dense<0xFF800000> : vector<8xf32>
    %15 = vector.multi_reduction <maximumf>, %14, %cst_15 [1] : vector<8x3xf32> to vector<8xf32>
    %16 = vector.shape_cast %15 : vector<8xf32> to vector<8x1xf32>
    %17 = vector.broadcast %16 : vector<8x1xf32> to vector<8x3xf32>
    %18 = arith.subf %14, %17 : vector<8x3xf32>
    %19 = math.exp %18 : vector<8x3xf32>
    %cst_16 = arith.constant dense<0.000000e+00> : vector<8xf32>
    %20 = vector.multi_reduction <add>, %19, %cst_16 [1] : vector<8x3xf32> to vector<8xf32>
    %21 = vector.shape_cast %20 : vector<8xf32> to vector<8x1xf32>
    %22 = tpu.reciprocal %21 {approx = true} : vector<8x1xf32> -> vector<8x1xf32>
    %23 = vector.broadcast %22 : vector<8x1xf32> to vector<8x3xf32>
    %24 = arith.mulf %19, %23 : vector<8x3xf32>
    %25 = vector.extract_strided_slice %24 {offsets = [0, 0], sizes = [8, 1], strides = [1, 1]} : vector<8x3xf32> to vector<8x1xf32>
    %26 = vector.extract_strided_slice %13 {offsets = [0, 3], sizes = [8, 16], strides = [1, 1]} : vector<8x51xf32> to vector<8x16xf32>
    %27 = vector.broadcast %25 : vector<8x1xf32> to vector<8x16xf32>
    %28 = arith.mulf %27, %26 : vector<8x16xf32>
    %29 = vector.extract_strided_slice %24 {offsets = [0, 1], sizes = [8, 1], strides = [1, 1]} : vector<8x3xf32> to vector<8x1xf32>
    %30 = vector.extract_strided_slice %13 {offsets = [0, 19], sizes = [8, 16], strides = [1, 1]} : vector<8x51xf32> to vector<8x16xf32>
    %31 = vector.broadcast %29 : vector<8x1xf32> to vector<8x16xf32>
    %32 = arith.mulf %31, %30 : vector<8x16xf32>
    %33 = arith.addf %28, %32 : vector<8x16xf32>
    %34 = vector.extract_strided_slice %24 {offsets = [0, 2], sizes = [8, 1], strides = [1, 1]} : vector<8x3xf32> to vector<8x1xf32>
    %35 = vector.extract_strided_slice %13 {offsets = [0, 35], sizes = [8, 16], strides = [1, 1]} : vector<8x51xf32> to vector<8x16xf32>
    %36 = vector.broadcast %34 : vector<8x1xf32> to vector<8x16xf32>
    %37 = arith.mulf %36, %35 : vector<8x16xf32>
    %38 = arith.addf %33, %37 : vector<8x16xf32>
    %c0_17 = arith.constant 0 : index
    %c0_18 = arith.constant 0 : index
    %39 = vector.load %arg8[%c0_17, %c0_18] : memref<8x16xf32, #tpu.memory_space<vmem>>, vector<8x16xf32>
    tpu.vector_store %arg8[%c0_17, %c0_18], %38 {strides = array<i32>} : memref<8x16xf32, #tpu.memory_space<vmem>>, vector<8x16xf32>,
    return
  }
  func.func @transform_0(%arg0: i32) -> (i32, i32) {
    %c0_i32 = arith.constant 0 : i32
    %c0_i32_0 = arith.constant 0 : i32
    return %arg0, %c0_i32 : i32, i32
  }
  func.func @transform_1(%arg0: i32) -> (i32, i32) {
    %c0_i32 = arith.constant 0 : i32
    %c0_i32_0 = arith.constant 0 : i32
    return %arg0, %c0_i32 : i32, i32
  }
  func.func @transform_2(%arg0: i32) -> (i32, i32) {
    %c0_i32 = arith.constant 0 : i32
    %c0_i32_0 = arith.constant 0 : i32
    return %arg0, %c0_i32 : i32, i32
  }
  func.func @transform_3(%arg0: i32) -> (i32, i32) {
    %c0_i32 = arith.constant 0 : i32
    %c0_i32_0 = arith.constant 0 : i32
    %c0_i32_1 = arith.constant 0 : i32
    return %c0_i32, %c0_i32_0 : i32, i32
  }
  func.func @transform_4(%arg0: i32) -> (i32, i32) {
    %c0_i32 = arith.constant 0 : i32
    %c0_i32_0 = arith.constant 0 : i32
    %c0_i32_1 = arith.constant 0 : i32
    return %c0_i32, %c0_i32_0 : i32, i32
  }
  func.func @transform_5(%arg0: i32) -> (i32, i32) {
    %c0_i32 = arith.constant 0 : i32
    %c0_i32_0 = arith.constant 0 : i32
    %c0_i32_1 = arith.constant 0 : i32
    return %c0_i32, %c0_i32_0 : i32, i32
  }
  func.func @transform_6(%arg0: i32) -> (i32, i32) {
    %c0_i32 = arith.constant 0 : i32
    %c0_i32_0 = arith.constant 0 : i32
    %c0_i32_1 = arith.constant 0 : i32
    return %c0_i32, %c0_i32_0 : i32, i32
  }
  func.func @transform_7(%arg0: i32) -> (i32, i32) {
    %c0_i32 = arith.constant 0 : i32
    %c0_i32_0 = arith.constant 0 : i32
    return %arg0, %c0_i32 : i32, i32
  }
}

</mosaic_0001>

<llo_original>
// kernel: tpu_custom_call.1
$region0: #{tpu_custom_call.1}
  #allocation0 [shape = 'u32[]', space=smem, size = 0x4, offset = 0x4, fixed_abs, tag = 'smem constant byte address 0x4 - core index']
  #allocation1 [shape = 'u32[144,128]{1,0:T(1,128)}', space=vmem, size = 0x12000, scoped, tag = 'internal scratch']
  %s0 = inlined_call_operand.hbm [shape: f32[8,24], index: 0, kind: input, shape index: {}]
  %s1 = inlined_call_operand.hbm [shape: f32[8,32], index: 1, kind: input, shape index: {}]
  %s2 = inlined_call_operand.hbm [shape: f32[8,16], index: 2, kind: input, shape index: {}]
  %s3 = inlined_call_operand.hbm [shape: f32[24,51], index: 3, kind: input, shape index: {}]
  %s4 = inlined_call_operand.hbm [shape: f32[32,51], index: 4, kind: input, shape index: {}]
  %s5 = inlined_call_operand.hbm [shape: f32[16,51], index: 5, kind: input, shape index: {}]
  %s6 = inlined_call_operand.vmem [shape: f32[1,51], index: 6, kind: input, shape index: {}]
  %s7 = inlined_call_operand.hbm [shape: f32[8,16], index: 7, kind: output, shape index: {}]
  %s8 = sld [smem:[#allocation0]]
  $region62: #{tpu_custom_call.1} parent=0
    _
  %s10 = ssub.s32 1, %s8
  %s11 = scalar_select 0, %s10, %s8
  $region1: #{tpu_custom_call.1} parent=0
    #allocation2 [shape = 'u8[4096]{0}', space=vmem, size = 0x1000, scoped, tag = 'input window, operand 0, single buffered']
    #allocation3 [shape = 's32[1]{0}', space=sflag, size = 0x4, scoped, tag = 'scoped memory for tpu_custom_call.1']
    #allocation4 [shape = 's32[1]{0}', space=sflag, size = 0x4, scoped, tag = 'scoped memory for tpu_custom_call.1']
    #allocation5 [shape = 'u8[4096]{0}', space=vmem, size = 0x1000, scoped, tag = 'input window, operand 1, single buffered']
    #allocation6 [shape = 's32[1]{0}', space=sflag, size = 0x4, scoped, tag = 'scoped memory for tpu_custom_call.1']
    #allocation7 [shape = 'u8[4096]{0}', space=vmem, size = 0x1000, scoped, tag = 'input window, operand 2, single buffered']
    #allocation8 [shape = 'u8[12288]{0}', space=vmem, size = 0x3000, scoped, tag = 'input window, operand 3, single buffered']
    #allocation9 [shape = 's32[1]{0}', space=sflag, size = 0x4, scoped, tag = 'scoped memory for tpu_custom_call.1']
    #allocation10 [shape = 'u8[16384]{0}', space=vmem, size = 0x4000, scoped, tag = 'input window, operand 4, single buffered']
    #allocation11 [shape = 'u8[8192]{0}', space=vmem, size = 0x2000, scoped, tag = 'input window, operand 5, single buffered']
    #allocation12 [shape = 's32[1]{0}', space=sflag, size = 0x4, scoped, tag = 'scoped memory for tpu_custom_call.1']
    #allocation13 [shape = 'u8[4096]{0}', space=vmem, size = 0x1000, scoped, tag = 'output window, operand 0, single buffered']
    %12 = vsyncpa [#allocation3], 0
    %13 = vsyncpa [#allocation6], 0
    %14 = vsyncpa [#allocation9], 0
    %15 = vsyncpa [#allocation12], 0
    %16 = vsyncpa [#allocation4], 0
    // Predicated region
    $region2: #{tpu_custom_call.1} parent=1 // pred_check
      _
    $region3: #{tpu_custom_call.1} parent=1 // pred_check_branch
      %18 = sbr.rel (0) target = $region5
    $region4: #{tpu_custom_call.1} parent=1 // pred_region
      %s20 = ssub.s32 128, 128
      %21 = vsyncadd [#allocation3], %s20
      %s23 = sshll.u32 [#allocation2], 4
      %s24 = int_to_ptr.vmem [resolvable:$true] %s23
      %26 = dma.hbm_to_vmem [thread:$0]  %s0, 128, %s24, [#allocation3]
    $region5: #{tpu_custom_call.1} parent=1 // pred_fallthru
      _
    // Predicated region
    $region6: #{tpu_custom_call.1} parent=1 // pred_check
      _
    $region7: #{tpu_custom_call.1} parent=1 // pred_check_branch
      %28 = sbr.rel (0) target = $region9
    $region8: #{tpu_custom_call.1} parent=1 // pred_region
      %s30 = ssub.s32 128, 128
      %31 = vsyncadd [#allocation6], %s30
      %s33 = sshll.u32 [#allocation5], 4
      %s34 = int_to_ptr.vmem [resolvable:$true] %s33
      %36 = dma.hbm_to_vmem [thread:$0]  %s1, 128, %s34, [#allocation6]
    $region9: #{tpu_custom_call.1} parent=1 // pred_fallthru
      _
    // Predicated region
    $region10: #{tpu_custom_call.1} parent=1 // pred_check
      _
    $region11: #{tpu_custom_call.1} parent=1 // pred_check_branch
      %38 = sbr.rel (0) target = $region13
    $region12: #{tpu_custom_call.1} parent=1 // pred_region
      %s40 = ssub.s32 128, 128
      %41 = vsyncadd [#allocation6], %s40
      %s43 = sshll.u32 [#allocation7], 4
      %s44 = int_to_ptr.vmem [resolvable:$true] %s43
      %46 = dma.hbm_to_vmem [thread:$0]  %s2, 128, %s44, [#allocation6]
    $region13: #{tpu_custom_call.1} parent=1 // pred_fallthru
      _
    // Predicated region
    $region14: #{tpu_custom_call.1} parent=1 // pred_check
      _
    $region15: #{tpu_custom_call.1} parent=1 // pred_check_branch
      %48 = sbr.rel (0) target = $region17
    $region16: #{tpu_custom_call.1} parent=1 // pred_region
      %s50 = ssub.s32 384, 384
      %51 = vsyncadd [#allocation9], %s50
      %s52 = sshll.u32 [#allocation8], 4
      %s53 = int_to_ptr.vmem [resolvable:$true] %s52
      %58 = dma.hbm_to_vmem [thread:$0]  %s3, 384, %s53, [#allocation9], 128, 128, 8
    $region17: #{tpu_custom_call.1} parent=1 // pred_fallthru
      _
    // Predicated region
    $region18: #{tpu_custom_call.1} parent=1 // pred_check
      _
    $region19: #{tpu_custom_call.1} parent=1 // pred_check_branch
      %60 = sbr.rel (0) target = $region21
    $region20: #{tpu_custom_call.1} parent=1 // pred_region
      %s62 = ssub.s32 512, 512
      %63 = vsyncadd [#allocation9], %s62
      %s64 = sshll.u32 [#allocation10], 4
      %s65 = int_to_ptr.vmem [resolvable:$true] %s64
      %70 = dma.hbm_to_vmem [thread:$0]  %s4, 512, %s65, [#allocation9], 128, 128, 8
    $region21: #{tpu_custom_call.1} parent=1 // pred_fallthru
      _
    // Predicated region
    $region22: #{tpu_custom_call.1} parent=1 // pred_check
      _
    $region23: #{tpu_custom_call.1} parent=1 // pred_check_branch
      %72 = sbr.rel (0) target = $region25
    $region24: #{tpu_custom_call.1} parent=1 // pred_region
      %s74 = ssub.s32 256, 256
      %75 = vsyncadd [#allocation12], %s74
      %s76 = sshll.u32 [#allocation11], 4
      %s77 = int_to_ptr.vmem [resolvable:$true] %s76
      %82 = dma.hbm_to_vmem [thread:$0]  %s5, 256, %s77, [#allocation12], 128, 128, 8
    $region25: #{tpu_custom_call.1} parent=1 // pred_fallthru
      _
    // Predicated region
    $region26: #{tpu_custom_call.1} parent=1 // pred_check
      _
    $region27: #{tpu_custom_call.1} parent=1 // pred_check_branch
      %84 = sbr.rel (0) target = $region29
    $region28: #{tpu_custom_call.1} parent=1 // pred_region
      _
    $region29: #{tpu_custom_call.1} parent=1 // pred_fallthru
      _
    // Predicated region
    $region30: #{tpu_custom_call.1} parent=1 // pred_check
      _
    $region31: #{tpu_custom_call.1} parent=1 // pred_check_branch
      %86 = sbr.rel (0) target = $region33
    $region32: #{tpu_custom_call.1} parent=1 // pred_region
      %87 = dma.done [#allocation3], 128
    $region33: #{tpu_custom_call.1} parent=1 // pred_fallthru
      _
    // Predicated region
    $region34: #{tpu_custom_call.1} parent=1 // pred_check
      _
    $region35: #{tpu_custom_call.1} parent=1 // pred_check_branch
      %89 = sbr.rel (0) target = $region37
    $region36: #{tpu_custom_call.1} parent=1 // pred_region
      %90 = dma.done [#allocation6], 128
    $region37: #{tpu_custom_call.1} parent=1 // pred_fallthru
      _
    // Predicated region
    $region38: #{tpu_custom_call.1} parent=1 // pred_check
      _
    $region39: #{tpu_custom_call.1} parent=1 // pred_check_branch
      %92 = sbr.rel (0) target = $region41
    $region40: #{tpu_custom_call.1} parent=1 // pred_region
      %93 = dma.done [#allocation6], 128
    $region41: #{tpu_custom_call.1} parent=1 // pred_fallthru
      _
    // Predicated region
    $region42: #{tpu_custom_call.1} parent=1 // pred_check
      _
    $region43: #{tpu_custom_call.1} parent=1 // pred_check_branch
      %95 = sbr.rel (0) target = $region45
    $region44: #{tpu_custom_call.1} parent=1 // pred_region
      %96 = dma.done [#allocation9], 384
    $region45: #{tpu_custom_call.1} parent=1 // pred_fallthru
      _
    // Predicated region
    $region46: #{tpu_custom_call.1} parent=1 // pred_check
      _
    $region47: #{tpu_custom_call.1} parent=1 // pred_check_branch
      %98 = sbr.rel (0) target = $region49
    $region48: #{tpu_custom_call.1} parent=1 // pred_region
      %99 = dma.done [#allocation9], 512
    $region49: #{tpu_custom_call.1} parent=1 // pred_fallthru
      _
    // Predicated region
    $region50: #{tpu_custom_call.1} parent=1 // pred_check
      _
    $region51: #{tpu_custom_call.1} parent=1 // pred_check_branch
      %101 = sbr.rel (0) target = $region53
    $region52: #{tpu_custom_call.1} parent=1 // pred_region
      %102 = dma.done [#allocation12], 256
    $region53: #{tpu_custom_call.1} parent=1 // pred_fallthru
      _
    %v103 = vld [vmem:[#allocation2] sm:$0xff]
    %v104 = vld [vmem:[#allocation8] sm:$0xff]
    %v105 = vld [vmem:[#allocation8 + $0x8] sm:$0xff]
    %v106 = vld [vmem:[#allocation8 + $0x10] sm:$0xff]
    %v107 = vld [vmem:[#allocation5] sm:$0xff]
    %v108 = vld [vmem:[#allocation10] sm:$0xff]
    %v109 = vld [vmem:[#allocation10 + $0x8] sm:$0xff]
    %v110 = vld [vmem:[#allocation10 + $0x10] sm:$0xff]
    %v111 = vld [vmem:[#allocation10 + $0x18] sm:$0xff]
    %vm112 = vcmask 261120
    %v114 = vsel %vm112, %v107, 0
    %116 = vmatprep.subr.mxu0 0.0
    %117 = vmatpush1.msra.mxu0 0.0
    %118 = vmatprep.subr.mxu0 0.0
    %119 = vmatpush1.msra.mxu0 0.0
    %120 = vmatprep.subr.mxu0 0.0
    %121 = vmatpush1.msra.mxu0 0.0
    %122 = vmatprep.subr.mxu0 0.0
    %123 = vmatpush1.msra.mxu0 0.0
    %124 = vmatprep.subr.mxu0 0.0
    %125 = vmatpush1.msra.mxu0 0.0
    %126 = vmatprep.subr.mxu0 0.0
    %127 = vmatpush1.msra.mxu0 0.0
    %128 = vmatprep.subr.mxu0 0.0
    %129 = vmatpush1.msra.mxu0 0.0
    %130 = vmatprep.subr.mxu0 0.0
    %131 = vmatpush1.msra.mxu0 0.0
    %132 = vmatprep.subr.mxu0 0.0
    %133 = vmatpush1.msra.mxu0 0.0
    %134 = vmatprep.subr.mxu0 0.0
    %135 = vmatpush1.msra.mxu0 0.0
    %136 = vmatprep.subr.mxu0 0.0
    %137 = vmatpush1.msra.mxu0 0.0
    %138 = vmatprep.subr.mxu0 0.0
    %139 = vmatpush1.msra.mxu0 0.0
    %140 = vmatprep.subr.mxu0 0.0
    %141 = vmatpush1.msra.mxu0 %v111
    %142 = vmatprep.subr.mxu0 0.0
    %143 = vmatpush1.msra.mxu0 %v110
    %144 = vmatprep.subr.mxu0 0.0
    %145 = vmatpush1.msra.mxu0 %v109
    %146 = vmatprep.subr.mxu0 0.0
    %147 = vmatpush1.msra.mxu0 %v108
    %148 = vmatprep.subr.mxu0 0.0
    %149 = vmatpush2.msra.mxu0 0.0
    %150 = vmatprep.subr.mxu0 0.0
    %151 = vmatpush2.msra.mxu0 0.0
    %152 = vmatprep.subr.mxu0 0.0
    %153 = vmatpush2.msra.mxu0 0.0
    %154 = vmatprep.subr.mxu0 0.0
    %155 = vmatpush2.msra.mxu0 0.0
    %156 = vmatprep.subr.mxu0 0.0
    %157 = vmatpush2.msra.mxu0 0.0
    %158 = vmatprep.subr.mxu0 0.0
    %159 = vmatpush2.msra.mxu0 0.0
    %160 = vmatprep.subr.mxu0 0.0
    %161 = vmatpush2.msra.mxu0 0.0
    %162 = vmatprep.subr.mxu0 0.0
    %163 = vmatpush2.msra.mxu0 0.0
    %164 = vmatprep.subr.mxu0 0.0
    %165 = vmatpush2.msra.mxu0 0.0
    %166 = vmatprep.subr.mxu0 0.0
    %167 = vmatpush2.msra.mxu0 0.0
    %168 = vmatprep.subr.mxu0 0.0
    %169 = vmatpush2.msra.mxu0 0.0
    %170 = vmatprep.subr.mxu0 0.0
    %171 = vmatpush2.msra.mxu0 0.0
    %172 = vmatprep.subr.mxu0 0.0
    %173 = vmatpush2.msra.mxu0 0.0
    %174 = vmatprep.subr.mxu0 0.0
    %175 = vmatpush2.msra.mxu0 0.0
    %176 = vmatprep.subr.mxu0 0.0
    %177 = vmatpush2.msra.mxu0 0.0
    %178 = vmatprep.subr.mxu0 0.0
    %179 = vmatpush2.msra.mxu0 0.0
    %180 = vmatprep.mubr.f32.mxu0 0.0
    %181 = vmatmul.mubr.f32.gmra.mxu0 %v114
    %v182 = vpop.f32.mrf.mxu0
    %v183 = vadd.f32 0.0, %v182
    %v184 = vpop.f32.mrf.mxu0
    %185 = vdwg.mxu0
    %vm186 = vcmask 195584
    %v188 = vsel %vm186, %v103, 0
    %190 = vmatprep.subr.mxu0 0.0
    %191 = vmatpush1.msra.mxu0 0.0
    %192 = vmatprep.subr.mxu0 0.0
    %193 = vmatpush1.msra.mxu0 0.0
    %194 = vmatprep.subr.mxu0 0.0
    %195 = vmatpush1.msra.mxu0 0.0
    %196 = vmatprep.subr.mxu0 0.0
    %197 = vmatpush1.msra.mxu0 0.0
    %198 = vmatprep.subr.mxu0 0.0
    %199 = vmatpush1.msra.mxu0 0.0
    %200 = vmatprep.subr.mxu0 0.0
    %201 = vmatpush1.msra.mxu0 0.0
    %202 = vmatprep.subr.mxu0 0.0
    %203 = vmatpush1.msra.mxu0 0.0
    %204 = vmatprep.subr.mxu0 0.0
    %205 = vmatpush1.msra.mxu0 0.0
    %206 = vmatprep.subr.mxu0 0.0
    %207 = vmatpush1.msra.mxu0 0.0
    %208 = vmatprep.subr.mxu0 0.0
    %209 = vmatpush1.msra.mxu0 0.0
    %210 = vmatprep.subr.mxu0 0.0
    %211 = vmatpush1.msra.mxu0 0.0
    %212 = vmatprep.subr.mxu0 0.0
    %213 = vmatpush1.msra.mxu0 0.0
    %214 = vmatprep.subr.mxu0 0.0
    %215 = vmatpush1.msra.mxu0 0.0
    %216 = vmatprep.subr.mxu0 0.0
    %217 = vmatpush1.msra.mxu0 %v106
    %218 = vmatprep.subr.mxu0 0.0
    %219 = vmatpush1.msra.mxu0 %v105
    %220 = vmatprep.subr.mxu0 0.0
    %221 = vmatpush1.msra.mxu0 %v104
    %222 = vmatprep.subr.mxu0 0.0
    %223 = vmatpush2.msra.mxu0 0.0
    %224 = vmatprep.subr.mxu0 0.0
    %225 = vmatpush2.msra.mxu0 0.0
    %226 = vmatprep.subr.mxu0 0.0
    %227 = vmatpush2.msra.mxu0 0.0
    %228 = vmatprep.subr.mxu0 0.0
    %229 = vmatpush2.msra.mxu0 0.0
    %230 = vmatprep.subr.mxu0 0.0
    %231 = vmatpush2.msra.mxu0 0.0
    %232 = vmatprep.subr.mxu0 0.0
    %233 = vmatpush2.msra.mxu0 0.0
    %234 = vmatprep.subr.mxu0 0.0
    %235 = vmatpush2.msra.mxu0 0.0
    %236 = vmatprep.subr.mxu0 0.0
    %237 = vmatpush2.msra.mxu0 0.0
    %238 = vmatprep.subr.mxu0 0.0
    %239 = vmatpush2.msra.mxu0 0.0
    %240 = vmatprep.subr.mxu0 0.0
    %241 = vmatpush2.msra.mxu0 0.0
    %242 = vmatprep.subr.mxu0 0.0
    %243 = vmatpush2.msra.mxu0 0.0
    %244 = vmatprep.subr.mxu0 0.0
    %245 = vmatpush2.msra.mxu0 0.0
    %246 = vmatprep.subr.mxu0 0.0
    %247 = vmatpush2.msra.mxu0 0.0
    %248 = vmatprep.subr.mxu0 0.0
    %249 = vmatpush2.msra.mxu0 0.0
    %250 = vmatprep.subr.mxu0 0.0
    %251 = vmatpush2.msra.mxu0 0.0
    %252 = vmatprep.subr.mxu0 0.0
    %253 = vmatpush2.msra.mxu0 0.0
    %254 = vmatprep.mubr.f32.mxu0 0.0
    %255 = vmatmul.mubr.f32.gmra.mxu0 %v188
    %v256 = vpop.f32.mrf.mxu0
    %v257 = vadd.f32 %v183, %v256
    %v258 = vpop.f32.mrf.mxu0
    %259 = vdwg.mxu0
    %v260 = vld [vmem:[#allocation7] sm:$0xff]
    %v261 = vld [vmem:[#allocation11] sm:$0xff]
    %v262 = vld [vmem:[#allocation11 + $0x8] sm:$0xff]
    %vm263 = vcmask 130048
    %v265 = vsel %vm263, %v260, 0
    %267 = vmatprep.subr.mxu0 0.0
    %268 = vmatpush1.msra.mxu0 0.0
    %269 = vmatprep.subr.mxu0 0.0
    %270 = vmatpush1.msra.mxu0 0.0
    %271 = vmatprep.subr.mxu0 0.0
    %272 = vmatpush1.msra.mxu0 0.0
    %273 = vmatprep.subr.mxu0 0.0
    %274 = vmatpush1.msra.mxu0 0.0
    %275 = vmatprep.subr.mxu0 0.0
    %276 = vmatpush1.msra.mxu0 0.0
    %277 = vmatprep.subr.mxu0 0.0
    %278 = vmatpush1.msra.mxu0 0.0
    %279 = vmatprep.subr.mxu0 0.0
    %280 = vmatpush1.msra.mxu0 0.0
    %281 = vmatprep.subr.mxu0 0.0
    %282 = vmatpush1.msra.mxu0 0.0
    %283 = vmatprep.subr.mxu0 0.0
    %284 = vmatpush1.msra.mxu0 0.0
    %285 = vmatprep.subr.mxu0 0.0
    %286 = vmatpush1.msra.mxu0 0.0
    %287 = vmatprep.subr.mxu0 0.0
    %288 = vmatpush1.msra.mxu0 0.0
    %289 = vmatprep.subr.mxu0 0.0
    %290 = vmatpush1.msra.mxu0 0.0
    %291 = vmatprep.subr.mxu0 0.0
    %292 = vmatpush1.msra.mxu0 0.0
    %293 = vmatprep.subr.mxu0 0.0
    %294 = vmatpush1.msra.mxu0 0.0
    %295 = vmatprep.subr.mxu0 0.0
    %296 = vmatpush1.msra.mxu0 %v262
    %297 = vmatprep.subr.mxu0 0.0
    %298 = vmatpush1.msra.mxu0 %v261
    %299 = vmatprep.subr.mxu0 0.0
    %300 = vmatpush2.msra.mxu0 0.0
    %301 = vmatprep.subr.mxu0 0.0
    %302 = vmatpush2.msra.mxu0 0.0
    %303 = vmatprep.subr.mxu0 0.0
    %304 = vmatpush2.msra.mxu0 0.0
    %305 = vmatprep.subr.mxu0 0.0
    %306 = vmatpush2.msra.mxu0 0.0
    %307 = vmatprep.subr.mxu0 0.0
    %308 = vmatpush2.msra.mxu0 0.0
    %309 = vmatprep.subr.mxu0 0.0
    %310 = vmatpush2.msra.mxu0 0.0
    %311 = vmatprep.subr.mxu0 0.0
    %312 = vmatpush2.msra.mxu0 0.0
    %313 = vmatprep.subr.mxu0 0.0
    %314 = vmatpush2.msra.mxu0 0.0
    %315 = vmatprep.subr.mxu0 0.0
    %316 = vmatpush2.msra.mxu0 0.0
    %317 = vmatprep.subr.mxu0 0.0
    %318 = vmatpush2.msra.mxu0 0.0
    %319 = vmatprep.subr.mxu0 0.0
    %320 = vmatpush2.msra.mxu0 0.0
    %321 = vmatprep.subr.mxu0 0.0
    %322 = vmatpush2.msra.mxu0 0.0
    %323 = vmatprep.subr.mxu0 0.0
    %324 = vmatpush2.msra.mxu0 0.0
    %325 = vmatprep.subr.mxu0 0.0
    %326 = vmatpush2.msra.mxu0 0.0
    %327 = vmatprep.subr.mxu0 0.0
    %328 = vmatpush2.msra.mxu0 0.0
    %329 = vmatprep.subr.mxu0 0.0
    %330 = vmatpush2.msra.mxu0 0.0
    %331 = vmatprep.mubr.f32.mxu0 0.0
    %332 = vmatmul.mubr.f32.gmra.mxu0 %v265
    %v333 = vpop.f32.mrf.mxu0
    %v334 = vadd.f32 0.0, %v333
    %v335 = vpop.f32.mrf.mxu0
    %336 = vdwg.mxu0
    %v337 = vadd.f32 %v257, %v334
    %v338 = vld [vmem:[%s6] sm:$0x1]
    %v340 = vlaneseq
    %v341 = vshrl.u32 %v340, 7
    %v342 = vsub.s32 0, %v341
    %v343 = vrot.slane %v338, %v342
    %v345 = vadd.f32 %v337, %v343
    %vm346 = vcmask 23552
    %v347 = vsel %vm346, %v345, -inf
    %348 = vmax.xlane.f32.xlu0 %v347
    %v349 = vpop.xlane.xlu0 %348
    %v350 = vsub.f32 %v345, %v349
    %v351 = vmul.f32 %v350, 1.442695
    %v352 = vpow.pop %v351
    %v353 = vsel %vm346, %v352, 0.0
    %354 = vadd.xlane.f32.xlu0 %v353
    %v355 = vpop.xlane.xlu0 %354
    %v356 = vrcp.pop %v355
    %v357 = vmul.f32 %v352, %v356
    %359 = vset.pattern.permute.xlu0 0
    %360 = vperm.xlu0 %359, %v357
    %v361 = vpop.permute.xlu0 %360
    %v363 = vmul.f32 %v361, %v345
    %364 = vset.pattern.permute.xlu0 1
    %365 = vperm.xlu0 %364, %v357
    %v366 = vpop.permute.xlu0 %365
    %v368 = vmul.f32 %v366, %v345
    %370 = vrot.lane.b32.xlu0 %v368, 112
    %v371 = vpop.permute.xlu0 %370
    %v373 = vadd.f32 %v363, %v371
    %374 = vset.pattern.permute.xlu0 2
    %375 = vperm.xlu0 %374, %v357
    %v376 = vpop.permute.xlu0 %375
    %v378 = vmul.f32 %v376, %v345
    %380 = vrot.lane.b32.xlu0 %v378, 96
    %v381 = vpop.permute.xlu0 %380
    %v383 = vadd.f32 %v373, %v381
    %385 = vrot.lane.b32.xlu0 %v383, 125
    %v386 = vpop.permute.xlu0 %385
    %388 = vst.msk [vmem:[#allocation13] sm:$0xff] %vm263, %v386
    // Predicated region
    $region54: #{tpu_custom_call.1} parent=1 // pred_check
      _
    $region55: #{tpu_custom_call.1} parent=1 // pred_check_branch
      %390 = sbr.rel (0) target = $region57
    $region56: #{tpu_custom_call.1} parent=1 // pred_region
      %s392 = ssub.s32 128, 128
      %393 = vsyncadd [#allocation4], %s392
      %s395 = sshll.u32 [#allocation13], 4
      %s396 = int_to_ptr.vmem [resolvable:$true] %s395
      %398 = dma.vmem_to_hbm [thread:$0]  %s396, 128, %s7, [#allocation4]
    $region57: #{tpu_custom_call.1} parent=1 // pred_fallthru
      _
    // Predicated region
    $region58: #{tpu_custom_call.1} parent=1 // pred_check
      _
    $region59: #{tpu_custom_call.1} parent=1 // pred_check_branch
      %400 = sbr.rel (0) target = $region61
    $region60: #{tpu_custom_call.1} parent=1 // pred_region
      %401 = dma.done [#allocation4], 128
    $region61: #{tpu_custom_call.1} parent=1 // pred_fallthru
      _
    %402 = vsyncpa [#allocation3], 1
    %403 = vsyncpa [#allocation6], 1
    %404 = vsyncpa [#allocation9], 1
    %405 = vsyncpa [#allocation12], 1
    %406 = vsyncpa [#allocation4], 1

</llo_original>
